<compile_context>
chip_gen: v6e
topology: v6e:2x2x1
jax: 0.10.0
libtpu: 0.0.40
codegen_flags: <defaults>
</compile_context>

<pallas_src>
import functools

import jax
import jax.numpy as jnp
from jax.experimental import pallas as pl
from jax.experimental.pallas import tpu as pltpu

IN_DIM = 310       # CFE input features
IN_PAD = 384       # 3 * 128, lane-aligned contraction dim for the first matmul
LANE = 128         # lane-dense merged output width
_SLOPE = 0.01      # nn.LeakyReLU default negative_slope (CFE and AdversarialNetwork)

# Packed weight blob layout (rows, all boundaries multiples of 128; bf16):
#   [   0: 384, 0:256]  w1   (310->256, rows 310:384 zero-padded)
#   [ 384: 640, 0:128]  w2   (256->128)
#   [ 640: 768, 0: 64]  w3   (128->64; output lanes padded to 128 inside kernel)
#   [ 768: 832, 0:  C]  wc   (class head)        } fused head block rows 768:896
#   [ 768: 832, 128:160] wa1 (64->32)            }
#   [ 896: 928, 0: 32]  wa2  (32->32)
#   [1024:1056, C]      wa3  (32->1, placed in lane C)
W_ROWS = 1152
W_COLS = 256
B_ROWS = 8          # bias blob rows (f32): b1,b2,b3,(bc||ba1),ba2,ba3,0,0


def _leaky_relu(x):
    # slope < 1  =>  max(x, slope*x) == LeakyReLU(x)
    return jnp.maximum(x, _SLOPE * x)


def _round_up(n, m):
    return ((n + m - 1) // m) * m


def dann_kernel(x_ref, w_ref, b_ref, out_ref, *, num_category):
    f32 = jnp.float32
    bf16 = jnp.bfloat16

    x = x_ref[...]                                               # [TB, 384] bf16

    # ---- shared CFE: 384(pad of 310) -> 256 -> 128 -> 64(pad 128), LeakyReLU(0.01) ----
    h = jnp.dot(x, w_ref[0:384, :], preferred_element_type=f32) + b_ref[0:1, :]
    h = _leaky_relu(h)                                           # [TB, 256]
    h = jnp.dot(h.astype(bf16), w_ref[384:640, 0:128],
                preferred_element_type=f32) + b_ref[1:2, 0:128]
    h = _leaky_relu(h)                                           # [TB, 128]
    feat = jnp.dot(h.astype(bf16), w_ref[640:768, 0:128],
                   preferred_element_type=f32) + b_ref[2:3, 0:128]
    feat = _leaky_relu(feat)                                     # [TB, 128]; lanes 64:128 == 0
    feat_bf = feat.astype(bf16)

    # ---- fused heads on one 256-wide MXU pass ----
    # lanes 0:128 -> class logits (cls_fc), lanes 128:160 -> domain ad_layer1 pre-act
    head = jnp.dot(feat_bf, w_ref[768:896, :],
                   preferred_element_type=f32) + b_ref[3:4, :]   # [TB, 256]
    cls = head[:, 0:128]                                         # class logits in lanes 0:C
    d = _leaky_relu(head[:, 128:256])                            # lanes 0:32 valid, rest 0

    # ---- domain head (AdversarialLayer forward is identity) ----
    # TODO(synk): nn.Dropout(0.5) masks and GradReverse backward (GRL schedule) are
    # training-only; this kernel implements the inference forward pass.
    d = jnp.dot(d.astype(bf16), w_ref[896:1024, 0:128],
                preferred_element_type=f32) + b_ref[4:5, 0:128]
    d = _leaky_relu(d)                                           # lanes 0:32 valid, rest 0
    dom = jnp.dot(d.astype(bf16), w_ref[1024:1152, 0:128],
                  preferred_element_type=f32) + b_ref[5:6, 0:128]  # logit in lane C, rest 0
    dom_sig = pl.reciprocal(1.0 + jnp.exp(-dom), approx=True)    # EUP recip + exp

    # merge: lanes 0..C-1 = class logits, lane C = sigmoid(domain), rest 0
    lane = jax.lax.broadcasted_iota(jnp.int32, cls.shape, 1)
    out_ref[...] = jnp.where(lane == num_category, dom_sig, cls)


def prepare_params(raw, number_of_category):
    """Pack the 14 natural-shape f32 params into one bf16 weight blob + one f32 bias blob."""
    (w1, b1, w2, b2, w3, b3, wc, bc, wa1, ba1, wa2, ba2, wa3, ba3) = raw
    C = number_of_category
    assert C + 1 <= LANE, "num_category must leave a spare lane for the domain output"

    wblob = jnp.zeros((W_ROWS, W_COLS), jnp.float32)
    wblob = wblob.at[0:IN_DIM, 0:256].set(w1)
    wblob = wblob.at[384:640, 0:128].set(w2)
    wblob = wblob.at[640:768, 0:64].set(w3)
    wblob = wblob.at[768:832, 0:C].set(wc)
    wblob = wblob.at[768:832, 128:160].set(wa1)
    wblob = wblob.at[896:928, 0:32].set(wa2)
    wblob = wblob.at[1024:1056, C].set(wa3[:, 0])
    wblob = wblob.astype(jnp.bfloat16)

    bblob = jnp.zeros((B_ROWS, W_COLS), jnp.float32)
    bblob = bblob.at[0, 0:256].set(b1[0])
    bblob = bblob.at[1, 0:128].set(b2[0])
    bblob = bblob.at[2, 0:64].set(b3[0])
    bblob = bblob.at[3, 0:C].set(bc[0])
    bblob = bblob.at[3, 128:160].set(ba1[0])
    bblob = bblob.at[4, 0:32].set(ba2[0])
    bblob = bblob.at[5, C].set(ba3[0, 0])
    return wblob, bblob


@functools.partial(jax.jit, static_argnames=("number_of_category",))
def dann_forward(x, wblob, bblob, *, number_of_category=4):
    B = x.shape[0]
    # Batch tile: up to 512 rows (≈85% of HBM roofline per tile-size sweep);
    # tiny batches collapse to a single 8-row-aligned tile.
    TB = max(8, min(512, _round_up(B, 8)))
    Bp = _round_up(B, TB)
    grid = (Bp // TB,)

    # Fuse the 310->384 pad with the f32->bf16 cast (single wrapper op, halves input DMA).
    xp = jnp.pad(x.astype(jnp.bfloat16),
                 ((0, Bp - B), (0, IN_PAD - x.shape[1])))

    flops = 2 * Bp * (IN_PAD * 256 + 256 * 128 + 128 * 128
                      + 128 * 256 + 128 * 128 + 128 * 128)
    bytes_accessed = (Bp * IN_PAD * 2            # bf16 input
                      + W_ROWS * W_COLS * 2      # bf16 weight blob (fetched once)
                      + B_ROWS * W_COLS * 4      # f32 bias blob
                      + Bp * LANE * 4)           # f32 merged output

    out = pl.pallas_call(
        functools.partial(dann_kernel, num_category=number_of_category),
        out_shape=jax.ShapeDtypeStruct((Bp, LANE), jnp.float32),
        grid=grid,
        in_specs=[
            pl.BlockSpec((TB, IN_PAD), lambda i: (i, 0)),          # x tile (double-buffered)
            pl.BlockSpec((W_ROWS, W_COLS), lambda i: (0, 0)),      # weight blob (resident)
            pl.BlockSpec((B_ROWS, W_COLS), lambda i: (0, 0)),      # bias blob (resident)
        ],
        out_specs=pl.BlockSpec((TB, LANE), lambda i: (i, 0)),
        compiler_params=pltpu.CompilerParams(
            dimension_semantics=("parallel",)),                    # v7x megacore sharding
        cost_estimate=pl.CostEstimate(flops=flops,
                                      transcendentals=2 * Bp * LANE,
                                      bytes_accessed=bytes_accessed),
    )(xp, wblob, bblob)

    clabel_pred = out[:B, :number_of_category]
    dlabel_pred = out[:B, number_of_category:number_of_category + 1]
    return clabel_pred, dlabel_pred


def make_params(key, number_of_category):
    """PyTorch-like init, natural shapes, weights stored [in, out]."""
    ks = jax.random.split(key, 7)

    def linear(k, fan_in, fan_out):
        kw, kb = jax.random.split(k)
        bound = float(fan_in) ** -0.5
        w = jax.random.uniform(kw, (fan_in, fan_out), jnp.float32, -bound, bound)
        b = jax.random.uniform(kb, (1, fan_out), jnp.float32, -bound, bound)
        return w, b

    w1, b1 = linear(ks[0], 310, 256)
    w2, b2 = linear(ks[1], 256, 128)
    w3, b3 = linear(ks[2], 128, 64)
    wc, bc = linear(ks[3], 64, number_of_category)
    # AdversarialNetwork init: weights normal(0, sigma), biases zero (as in the module).
    wa1 = 0.01 * jax.random.normal(ks[4], (64, 32), jnp.float32)
    wa2 = 0.01 * jax.random.normal(ks[5], (32, 32), jnp.float32)
    wa3 = 0.30 * jax.random.normal(ks[6], (32, 1), jnp.float32)
    ba1 = jnp.zeros((1, 32), jnp.float32)
    ba2 = jnp.zeros((1, 32), jnp.float32)
    ba3 = jnp.zeros((1, 1), jnp.float32)
    return (w1, b1, w2, b2, w3, b3, wc, bc, wa1, ba1, wa2, ba2, wa3, ba3)


def reference_forward(x, raw, number_of_category=4):
    """Pure-JAX reference using the SAME bf16 weight/activation casts as the kernel."""
    (w1, b1, w2, b2, w3, b3, wc, bc, wa1, ba1, wa2, ba2, wa3, ba3) = raw
    bf16 = jnp.bfloat16

    def dot(a, w):
        return jnp.dot(a.astype(bf16), w.astype(bf16), preferred_element_type=jnp.float32)

    h = _leaky_relu(dot(x, w1) + b1)
    h = _leaky_relu(dot(h, w2) + b2)
    feat = _leaky_relu(dot(h, w3) + b3)
    cls = dot(feat, wc) + bc
    d = _leaky_relu(dot(feat, wa1) + ba1)
    d = _leaky_relu(dot(d, wa2) + ba2)
    dom = 1.0 / (1.0 + jnp.exp(-(dot(d, wa3) + ba3)))
    return cls, dom


def _check(x, raw, wblob, bblob, number_of_category):
    clabel, dlabel = dann_forward(x, wblob, bblob,
                                  number_of_category=number_of_category)
    clabel = jax.block_until_ready(clabel)
    dlabel = jax.block_until_ready(dlabel)
    ref_c, ref_d = reference_forward(x, raw, number_of_category)
    B = x.shape[0]
    assert clabel.shape == (B, number_of_category), clabel.shape
    assert dlabel.shape == (B, 1), dlabel.shape
    assert jnp.allclose(clabel, ref_c, atol=1e-4, rtol=1e-4), "class-head mismatch vs reference"
    # domain head uses approx EUP reciprocal in-kernel -> slightly looser tolerance
    assert jnp.allclose(dlabel, ref_d, atol=2e-3, rtol=2e-3), "domain-head mismatch vs reference"


if __name__ == "__main__":
    number_of_category = 4

    key = jax.random.PRNGKey(0)
    kx, kx2, kp = jax.random.split(key, 3)
    raw_params = make_params(kp, number_of_category)
    wblob, bblob = prepare_params(raw_params, number_of_category)

    # small batch (single grid step)
    x_small = jax.random.normal(kx, (8, IN_DIM), jnp.float32)
    _check(x_small, raw_params, wblob, bblob, number_of_category)

    # larger batch (exercises the multi-step batch grid + padding path)
    x_big = jax.random.normal(kx2, (1050, IN_DIM), jnp.float32)
    _check(x_big, raw_params, wblob, bblob, number_of_category)

    print("KERNEL_OK")
</pallas_src>

<mosaic_0001>
module attributes {stable_mosaic.version = 11 : i64} {
  func.func @dann_kernel(%arg0: i32, %arg1: memref<8x384xbf16, #tpu.memory_space<vmem>>, %arg2: memref<1152x256xbf16, #tpu.memory_space<vmem>>, %arg3: memref<8x256xf32, #tpu.memory_space<vmem>>, %arg4: memref<8x128xf32, #tpu.memory_space<vmem>>) attributes {dimension_semantics = [#tpu.dimension_semantics<parallel>], iteration_bounds = array<i64: 1>, scalar_prefetch = 0 : i64, scratch_operands = 0 : i64, tpu.core_type = #tpu.core_type<tc>, window_params = [{transform_indices = @transform_0, window_bounds = array<i64: 8, 384>}, {pipeline_mode = #tpu.pipeline_mode<synchronous>, transform_indices = @transform_1, window_bounds = array<i64: 1152, 256>}, {pipeline_mode = #tpu.pipeline_mode<synchronous>, transform_indices = @transform_2, window_bounds = array<i64: 8, 256>}, {transform_indices = @transform_3, window_bounds = array<i64: 8, 128>}]} {
    %c0 = arith.constant 0 : index
    %c0_0 = arith.constant 0 : index
    %0 = vector.load %arg1[%c0, %c0_0] : memref<8x384xbf16, #tpu.memory_space<vmem>>, vector<8x384xbf16>
    %c0_1 = arith.constant 0 : index
    %c0_2 = arith.constant 0 : index
    %1 = vector.load %arg2[%c0_1, %c0_2] : memref<1152x256xbf16, #tpu.memory_space<vmem>>, vector<384x256xbf16>
    %cst = arith.constant dense<0.000000e+00> : vector<8x256xf32>
    %2 = tpu.matmul %0, %1, %cst {dimension_numbers = #tpu.dot_dimension_numbers<[1], [0], [0], [1], [0, 0, 1, 1], [], []>} : vector<8x384xbf16>, vector<384x256xbf16>, vector<8x256xf32> -> vector<8x256xf32>
    %c0_3 = arith.constant 0 : index
    %c0_4 = arith.constant 0 : index
    %3 = vector.load %arg3[%c0_3, %c0_4] : memref<8x256xf32, #tpu.memory_space<vmem>>, vector<1x256xf32>
    %4 = vector.broadcast %3 : vector<1x256xf32> to vector<8x256xf32>
    %5 = arith.addf %2, %4 : vector<8x256xf32>
    %cst_5 = arith.constant 0.00999999977 : f32
    %6 = vector.broadcast %cst_5 : f32 to vector<8x256xf32>
    %7 = arith.mulf %6, %5 : vector<8x256xf32>
    %8 = arith.maximumf %5, %7 : vector<8x256xf32>
    %9 = arith.truncf %8 : vector<8x256xf32> to vector<8x256xbf16>
    %c384 = arith.constant 384 : index
    %c0_6 = arith.constant 0 : index
    %10 = vector.load %arg2[%c384, %c0_6] : memref<1152x256xbf16, #tpu.memory_space<vmem>>, vector<256x128xbf16>
    %cst_7 = arith.constant dense<0.000000e+00> : vector<8x128xf32>
    %11 = tpu.matmul %9, %10, %cst_7 {dimension_numbers = #tpu.dot_dimension_numbers<[1], [0], [0], [1], [0, 0, 1, 1], [], []>} : vector<8x256xbf16>, vector<256x128xbf16>, vector<8x128xf32> -> vector<8x128xf32>
    %c1 = arith.constant 1 : index
    %c0_8 = arith.constant 0 : index
    %12 = vector.load %arg3[%c1, %c0_8] : memref<8x256xf32, #tpu.memory_space<vmem>>, vector<1x128xf32>
    %13 = vector.broadcast %12 : vector<1x128xf32> to vector<8x128xf32>
    %14 = arith.addf %11, %13 : vector<8x128xf32>
    %cst_9 = arith.constant 0.00999999977 : f32
    %15 = vector.broadcast %cst_9 : f32 to vector<8x128xf32>
    %16 = arith.mulf %15, %14 : vector<8x128xf32>
    %17 = arith.maximumf %14, %16 : vector<8x128xf32>
    %18 = arith.truncf %17 : vector<8x128xf32> to vector<8x128xbf16>
    %c640 = arith.constant 640 : index
    %c0_10 = arith.constant 0 : index
    %19 = vector.load %arg2[%c640, %c0_10] : memref<1152x256xbf16, #tpu.memory_space<vmem>>, vector<128x128xbf16>
    %cst_11 = arith.constant dense<0.000000e+00> : vector<8x128xf32>
    %20 = tpu.matmul %18, %19, %cst_11 {dimension_numbers = #tpu.dot_dimension_numbers<[1], [0], [0], [1], [0, 0, 1, 1], [], []>} : vector<8x128xbf16>, vector<128x128xbf16>, vector<8x128xf32> -> vector<8x128xf32>
    %c2 = arith.constant 2 : index
    %c0_12 = arith.constant 0 : index
    %21 = vector.load %arg3[%c2, %c0_12] : memref<8x256xf32, #tpu.memory_space<vmem>>, vector<1x128xf32>
    %22 = vector.broadcast %21 : vector<1x128xf32> to vector<8x128xf32>
    %23 = arith.addf %20, %22 : vector<8x128xf32>
    %cst_13 = arith.constant 0.00999999977 : f32
    %24 = vector.broadcast %cst_13 : f32 to vector<8x128xf32>
    %25 = arith.mulf %24, %23 : vector<8x128xf32>
    %26 = arith.maximumf %23, %25 : vector<8x128xf32>
    %27 = arith.truncf %26 : vector<8x128xf32> to vector<8x128xbf16>
    %c768 = arith.constant 768 : index
    %c0_14 = arith.constant 0 : index
    %28 = vector.load %arg2[%c768, %c0_14] : memref<1152x256xbf16, #tpu.memory_space<vmem>>, vector<128x256xbf16>
    %cst_15 = arith.constant dense<0.000000e+00> : vector<8x256xf32>
    %29 = tpu.matmul %27, %28, %cst_15 {dimension_numbers = #tpu.dot_dimension_numbers<[1], [0], [0], [1], [0, 0, 1, 1], [], []>} : vector<8x128xbf16>, vector<128x256xbf16>, vector<8x256xf32> -> vector<8x256xf32>
    %c3 = arith.constant 3 : index
    %c0_16 = arith.constant 0 : index
    %30 = vector.load %arg3[%c3, %c0_16] : memref<8x256xf32, #tpu.memory_space<vmem>>, vector<1x256xf32>
    %31 = vector.broadcast %30 : vector<1x256xf32> to vector<8x256xf32>
    %32 = arith.addf %29, %31 : vector<8x256xf32>
    %33 = vector.extract_strided_slice %32 {offsets = [0, 0], sizes = [8, 128], strides = [1, 1]} : vector<8x256xf32> to vector<8x128xf32>
    %34 = vector.extract_strided_slice %32 {offsets = [0, 128], sizes = [8, 128], strides = [1, 1]} : vector<8x256xf32> to vector<8x128xf32>
    %cst_17 = arith.constant 0.00999999977 : f32
    %35 = vector.broadcast %cst_17 : f32 to vector<8x128xf32>
    %36 = arith.mulf %35, %34 : vector<8x128xf32>
    %37 = arith.maximumf %34, %36 : vector<8x128xf32>
    %38 = arith.truncf %37 : vector<8x128xf32> to vector<8x128xbf16>
    %c896 = arith.constant 896 : index
    %c0_18 = arith.constant 0 : index
    %39 = vector.load %arg2[%c896, %c0_18] : memref<1152x256xbf16, #tpu.memory_space<vmem>>, vector<128x128xbf16>
    %cst_19 = arith.constant dense<0.000000e+00> : vector<8x128xf32>
    %40 = tpu.matmul %38, %39, %cst_19 {dimension_numbers = #tpu.dot_dimension_numbers<[1], [0], [0], [1], [0, 0, 1, 1], [], []>} : vector<8x128xbf16>, vector<128x128xbf16>, vector<8x128xf32> -> vector<8x128xf32>
    %c4 = arith.constant 4 : index
    %c0_20 = arith.constant 0 : index
    %41 = vector.load %arg3[%c4, %c0_20] : memref<8x256xf32, #tpu.memory_space<vmem>>, vector<1x128xf32>
    %42 = vector.broadcast %41 : vector<1x128xf32> to vector<8x128xf32>
    %43 = arith.addf %40, %42 : vector<8x128xf32>
    %cst_21 = arith.constant 0.00999999977 : f32
    %44 = vector.broadcast %cst_21 : f32 to vector<8x128xf32>
    %45 = arith.mulf %44, %43 : vector<8x128xf32>
    %46 = arith.maximumf %43, %45 : vector<8x128xf32>
    %47 = arith.truncf %46 : vector<8x128xf32> to vector<8x128xbf16>
    %c1024 = arith.constant 1024 : index
    %c0_22 = arith.constant 0 : index
    %48 = vector.load %arg2[%c1024, %c0_22] : memref<1152x256xbf16, #tpu.memory_space<vmem>>, vector<128x128xbf16>
    %cst_23 = arith.constant dense<0.000000e+00> : vector<8x128xf32>
    %49 = tpu.matmul %47, %48, %cst_23 {dimension_numbers = #tpu.dot_dimension_numbers<[1], [0], [0], [1], [0, 0, 1, 1], [], []>} : vector<8x128xbf16>, vector<128x128xbf16>, vector<8x128xf32> -> vector<8x128xf32>
    %c5 = arith.constant 5 : index
    %c0_24 = arith.constant 0 : index
    %50 = vector.load %arg3[%c5, %c0_24] : memref<8x256xf32, #tpu.memory_space<vmem>>, vector<1x128xf32>
    %51 = vector.broadcast %50 : vector<1x128xf32> to vector<8x128xf32>
    %52 = arith.addf %49, %51 : vector<8x128xf32>
    %cst_25 = arith.constant 0.000000e+00 : f32
    %53 = vector.broadcast %cst_25 : f32 to vector<8x128xf32>
    %54 = arith.subf %53, %52 : vector<8x128xf32>
    %55 = math.exp %54 : vector<8x128xf32>
    %cst_26 = arith.constant 1.000000e+00 : f32
    %56 = vector.broadcast %cst_26 : f32 to vector<8x128xf32>
    %57 = arith.addf %56, %55 : vector<8x128xf32>
    %58 = tpu.reciprocal %57 {approx = true} : vector<8x128xf32> -> vector<8x128xf32>
    %59 = tpu.iota {dimensions = array<i32: 1>} : vector<8x128xi32>
    %c4_i32 = arith.constant 4 : i32
    %60 = vector.broadcast %c4_i32 : i32 to vector<8x128xi32>
    %61 = arith.cmpi eq, %59, %60 : vector<8x128xi32>
    %62 = arith.select %61, %58, %33 : vector<8x128xi1>, vector<8x128xf32>
    %c0_27 = arith.constant 0 : index
    %c0_28 = arith.constant 0 : index
    %63 = vector.load %arg4[%c0_27, %c0_28] : memref<8x128xf32, #tpu.memory_space<vmem>>, vector<8x128xf32>
    tpu.vector_store %arg4[%c0_27, %c0_28], %62 {strides = array<i32>} : memref<8x128xf32, #tpu.memory_space<vmem>>, vector<8x128xf32>,
    return
  }
  func.func @transform_0(%arg0: i32) -> (i32, i32) {
    %c0_i32 = arith.constant 0 : i32
    %c0_i32_0 = arith.constant 0 : i32
    return %arg0, %c0_i32 : i32, i32
  }
  func.func @transform_1(%arg0: i32) -> (i32, i32) {
    %c0_i32 = arith.constant 0 : i32
    %c0_i32_0 = arith.constant 0 : i32
    %c0_i32_1 = arith.constant 0 : i32
    return %c0_i32, %c0_i32_0 : i32, i32
  }
  func.func @transform_2(%arg0: i32) -> (i32, i32) {
    %c0_i32 = arith.constant 0 : i32
    %c0_i32_0 = arith.constant 0 : i32
    %c0_i32_1 = arith.constant 0 : i32
    return %c0_i32, %c0_i32_0 : i32, i32
  }
  func.func @transform_3(%arg0: i32) -> (i32, i32) {
    %c0_i32 = arith.constant 0 : i32
    %c0_i32_0 = arith.constant 0 : i32
    return %arg0, %c0_i32 : i32, i32
  }
}

</mosaic_0001>

<llo_original>
// kernel: dann_forward.1
$region0: #{dann_forward.1}
  #allocation0 [shape = 'u32[]', space=smem, size = 0x4, offset = 0x4, fixed_abs, tag = 'smem constant byte address 0x4 - core index']
  #allocation1 [shape = 'u32[144,128]{1,0:T(1,128)}', space=vmem, size = 0x12000, scoped, tag = 'internal scratch']
  %s0 = inlined_call_operand.vmem [shape: bf16[8,384], index: 0, kind: input, shape index: {}]
  %s1 = inlined_call_operand.hbm [shape: bf16[1152,256], index: 1, kind: input, shape index: {}]
  %s2 = inlined_call_operand.vmem [shape: f32[8,256], index: 2, kind: input, shape index: {}]
  %s3 = inlined_call_operand.vmem [shape: f32[8,128], index: 3, kind: output, shape index: {}]
  %s4 = sld [smem:[#allocation0]]
  $region26: #{dann_forward.1} parent=0
    _
  %s6 = ssub.s32 1, %s4
  %s7 = scalar_select 0, %s6, %s4
  $region1: #{dann_forward.1} parent=0
    #allocation2 [shape = 'u8[589824]{0}', space=vmem, size = 0x90000, scoped, tag = 'input window, operand 1, single buffered']
    #allocation3 [shape = 's32[1]{0}', space=sflag, size = 0x4, scoped, tag = 'scoped memory for dann_forward.1']
    %8 = vsyncpa [#allocation3], 0
    // Predicated region
    $region2: #{dann_forward.1} parent=1 // pred_check
      _
    $region3: #{dann_forward.1} parent=1 // pred_check_branch
      %10 = sbr.rel (0) target = $region5
    $region4: #{dann_forward.1} parent=1 // pred_region
      _
    $region5: #{dann_forward.1} parent=1 // pred_fallthru
      _
    // Predicated region
    $region6: #{dann_forward.1} parent=1 // pred_check
      _
    $region7: #{dann_forward.1} parent=1 // pred_check_branch
      %12 = sbr.rel (0) target = $region9
    $region8: #{dann_forward.1} parent=1 // pred_region
      %s14 = ssub.s32 18432, 18432
      %15 = vsyncadd [#allocation3], %s14
      %s16 = sshll.u32 [#allocation2], 4
      %s17 = int_to_ptr.vmem [resolvable:$true] %s16
      %22 = dma.hbm_to_vmem [thread:$0]  %s1, 18432, %s17, [#allocation3], 128, 128, 8
    $region9: #{dann_forward.1} parent=1 // pred_fallthru
      _
    // Predicated region
    $region10: #{dann_forward.1} parent=1 // pred_check
      _
    $region11: #{dann_forward.1} parent=1 // pred_check_branch
      %24 = sbr.rel (0) target = $region13
    $region12: #{dann_forward.1} parent=1 // pred_region
      _
    $region13: #{dann_forward.1} parent=1 // pred_fallthru
      _
    // Predicated region
    $region14: #{dann_forward.1} parent=1 // pred_check
      _
    $region15: #{dann_forward.1} parent=1 // pred_check_branch
      %26 = sbr.rel (0) target = $region17
    $region16: #{dann_forward.1} parent=1 // pred_region
      %27 = dma.done [#allocation3], 18432
    $region17: #{dann_forward.1} parent=1 // pred_fallthru
      _
    %v29 = vld [vmem:[%s0] sm:$0xff]
    %v30 = vld [vmem:[%s0 + $0x8] sm:$0xf]
    %v31 = vld [vmem:[#allocation2] sm:$0xff]
    %v32 = vld [vmem:[#allocation2 + $0x8] sm:$0xff]
    %v33 = vld [vmem:[#allocation2 + $0x10] sm:$0xff]
    %v34 = vld [vmem:[#allocation2 + $0x18] sm:$0xff]
    %v35 = vld [vmem:[#allocation2 + $0x20] sm:$0xff]
    %v36 = vld [vmem:[#allocation2 + $0x28] sm:$0xff]
    %v37 = vld [vmem:[#allocation2 + $0x30] sm:$0xff]
    %v38 = vld [vmem:[#allocation2 + $0x38] sm:$0xff]
    %v39 = vld [vmem:[#allocation2 + $0x40] sm:$0xff]
    %v40 = vld [vmem:[#allocation2 + $0x48] sm:$0xff]
    %v41 = vld [vmem:[#allocation2 + $0x50] sm:$0xff]
    %v42 = vld [vmem:[#allocation2 + $0x58] sm:$0xff]
    %v43 = vld [vmem:[#allocation2 + $0x60] sm:$0xff]
    %v44 = vld [vmem:[#allocation2 + $0x68] sm:$0xff]
    %v45 = vld [vmem:[#allocation2 + $0x70] sm:$0xff]
    %v46 = vld [vmem:[#allocation2 + $0x78] sm:$0xff]
    %v47 = vld [vmem:[#allocation2 + $0x80] sm:$0xff]
    %v48 = vld [vmem:[#allocation2 + $0x88] sm:$0xff]
    %v49 = vld [vmem:[#allocation2 + $0x90] sm:$0xff]
    %v50 = vld [vmem:[#allocation2 + $0x98] sm:$0xff]
    %v51 = vld [vmem:[#allocation2 + $0xa0] sm:$0xff]
    %v52 = vld [vmem:[#allocation2 + $0xa8] sm:$0xff]
    %v53 = vld [vmem:[#allocation2 + $0xb0] sm:$0xff]
    %v54 = vld [vmem:[#allocation2 + $0xb8] sm:$0xff]
    %v55 = vld [vmem:[#allocation2 + $0xc0] sm:$0xff]
    %v56 = vld [vmem:[#allocation2 + $0xc8] sm:$0xff]
    %v57 = vld [vmem:[#allocation2 + $0xd0] sm:$0xff]
    %v58 = vld [vmem:[#allocation2 + $0xd8] sm:$0xff]
    %v59 = vld [vmem:[#allocation2 + $0xe0] sm:$0xff]
    %v60 = vld [vmem:[#allocation2 + $0xe8] sm:$0xff]
    %v61 = vld [vmem:[#allocation2 + $0xf0] sm:$0xff]
    %v62 = vld [vmem:[#allocation2 + $0xf8] sm:$0xff]
    %v63 = vld [vmem:[#allocation2 + $0x100] sm:$0xff]
    %v64 = vld [vmem:[#allocation2 + $0x108] sm:$0xff]
    %v65 = vld [vmem:[#allocation2 + $0x110] sm:$0xff]
    %v66 = vld [vmem:[#allocation2 + $0x118] sm:$0xff]
    %v67 = vld [vmem:[#allocation2 + $0x120] sm:$0xff]
    %v68 = vld [vmem:[#allocation2 + $0x128] sm:$0xff]
    %v69 = vld [vmem:[#allocation2 + $0x130] sm:$0xff]
    %v70 = vld [vmem:[#allocation2 + $0x138] sm:$0xff]
    %v71 = vld [vmem:[#allocation2 + $0x140] sm:$0xff]
    %v72 = vld [vmem:[#allocation2 + $0x148] sm:$0xff]
    %v73 = vld [vmem:[#allocation2 + $0x150] sm:$0xff]
    %v74 = vld [vmem:[#allocation2 + $0x158] sm:$0xff]
    %v75 = vld [vmem:[#allocation2 + $0x160] sm:$0xff]
    %v76 = vld [vmem:[#allocation2 + $0x168] sm:$0xff]
    %v77 = vld [vmem:[#allocation2 + $0x170] sm:$0xff]
    %v78 = vld [vmem:[#allocation2 + $0x178] sm:$0xff]
    %v79 = vld [vmem:[%s2] ss:$8 sm:$0x3]
    %v81 = vlaneseq
    %v82 = vshrl.u32 %v81, 7
    %v83 = vsub.s32 0, %v82
    %v84 = vrot.slane %v79, %v83
    %v85 = vlaneseq
    %v86 = vshrl.u32 %v85, 7
    %v87 = vsub.s32 1, %v86
    %v88 = vrot.slane %v79, %v87
    %v93 = vunpack.c.l.b16 %v29
    %v94 = vunpack.c.h.b16 %v29
    %v95 = vunpack.c.l.b16 %v30
    %v96 = vpack.c.b16 %v93, %v93
    %v97 = vpack.c.b16 %v94, %v94
    %v98 = vpack.c.b16 %v95, %v95
    %v150 = vunpack.c.l.b16 %v31
    %v151 = vunpack.c.h.b16 %v31
    %v152 = vunpack.c.l.b16 %v32
    %v153 = vunpack.c.h.b16 %v32
    %v154 = vunpack.c.l.b16 %v33
    %v155 = vunpack.c.h.b16 %v33
    %v156 = vunpack.c.l.b16 %v34
    %v157 = vunpack.c.h.b16 %v34
    %v158 = vunpack.c.l.b16 %v35
    %v159 = vunpack.c.h.b16 %v35
    %v160 = vunpack.c.l.b16 %v36
    %v161 = vunpack.c.h.b16 %v36
    %v162 = vunpack.c.l.b16 %v37
    %v163 = vunpack.c.h.b16 %v37
    %v164 = vunpack.c.l.b16 %v38
    %v165 = vunpack.c.h.b16 %v38
    %v166 = vunpack.c.l.b16 %v39
    %v167 = vunpack.c.h.b16 %v39
    %v168 = vunpack.c.l.b16 %v40
    %v169 = vunpack.c.h.b16 %v40
    %v170 = vunpack.c.l.b16 %v41
    %v171 = vunpack.c.h.b16 %v41
    %v172 = vunpack.c.l.b16 %v42
    %v173 = vunpack.c.h.b16 %v42
    %v174 = vunpack.c.l.b16 %v43
    %v175 = vunpack.c.h.b16 %v43
    %v176 = vunpack.c.l.b16 %v44
    %v177 = vunpack.c.h.b16 %v44
    %v178 = vunpack.c.l.b16 %v45
    %v179 = vunpack.c.h.b16 %v45
    %v180 = vunpack.c.l.b16 %v46
    %v181 = vunpack.c.h.b16 %v46
    %v182 = vunpack.c.l.b16 %v47
    %v183 = vunpack.c.h.b16 %v47
    %v184 = vunpack.c.l.b16 %v48
    %v185 = vunpack.c.h.b16 %v48
    %v186 = vunpack.c.l.b16 %v49
    %v187 = vunpack.c.h.b16 %v49
    %v188 = vunpack.c.l.b16 %v50
    %v189 = vunpack.c.h.b16 %v50
    %v190 = vunpack.c.l.b16 %v51
    %v191 = vunpack.c.h.b16 %v51
    %v192 = vunpack.c.l.b16 %v52
    %v193 = vunpack.c.h.b16 %v52
    %v194 = vunpack.c.l.b16 %v53
    %v195 = vunpack.c.h.b16 %v53
    %v196 = vunpack.c.l.b16 %v54
    %v197 = vunpack.c.h.b16 %v54
    %v198 = vunpack.c.l.b16 %v55
    %v199 = vunpack.c.h.b16 %v55
    %v200 = vunpack.c.l.b16 %v56
    %v201 = vunpack.c.h.b16 %v56
    %v202 = vunpack.c.l.b16 %v57
    %v203 = vunpack.c.h.b16 %v57
    %v204 = vunpack.c.l.b16 %v58
    %v205 = vunpack.c.h.b16 %v58
    %v206 = vunpack.c.l.b16 %v59
    %v207 = vunpack.c.h.b16 %v59
    %v208 = vunpack.c.l.b16 %v60
    %v209 = vunpack.c.h.b16 %v60
    %v210 = vunpack.c.l.b16 %v61
    %v211 = vunpack.c.h.b16 %v61
    %v212 = vunpack.c.l.b16 %v62
    %v213 = vunpack.c.h.b16 %v62
    %v214 = vunpack.c.l.b16 %v63
    %v215 = vunpack.c.h.b16 %v63
    %v216 = vunpack.c.l.b16 %v64
    %v217 = vunpack.c.h.b16 %v64
    %v218 = vunpack.c.l.b16 %v65
    %v219 = vunpack.c.h.b16 %v65
    %v220 = vunpack.c.l.b16 %v66
    %v221 = vunpack.c.h.b16 %v66
    %v222 = vunpack.c.l.b16 %v67
    %v223 = vunpack.c.h.b16 %v67
    %v224 = vunpack.c.l.b16 %v68
    %v225 = vunpack.c.h.b16 %v68
    %v226 = vunpack.c.l.b16 %v69
    %v227 = vunpack.c.h.b16 %v69
    %v228 = vunpack.c.l.b16 %v70
    %v229 = vunpack.c.h.b16 %v70
    %v230 = vunpack.c.l.b16 %v71
    %v231 = vunpack.c.h.b16 %v71
    %v232 = vunpack.c.l.b16 %v72
    %v233 = vunpack.c.h.b16 %v72
    %v234 = vunpack.c.l.b16 %v73
    %v235 = vunpack.c.h.b16 %v73
    %v236 = vunpack.c.l.b16 %v74
    %v237 = vunpack.c.h.b16 %v74
    %v238 = vunpack.c.l.b16 %v75
    %v239 = vunpack.c.h.b16 %v75
    %v240 = vunpack.c.l.b16 %v76
    %v241 = vunpack.c.h.b16 %v76
    %v242 = vunpack.c.l.b16 %v77
    %v243 = vunpack.c.h.b16 %v77
    %v244 = vunpack.c.l.b16 %v78
    %v245 = vunpack.c.h.b16 %v78
    %v246 = vpack.c.b16 %v152, %v150
    %v247 = vpack.c.b16 %v153, %v151
    %v248 = vpack.c.b16 %v156, %v154
    %v249 = vpack.c.b16 %v157, %v155
    %v250 = vpack.c.b16 %v160, %v158
    %v251 = vpack.c.b16 %v161, %v159
    %v252 = vpack.c.b16 %v164, %v162
    %v253 = vpack.c.b16 %v165, %v163
    %v254 = vpack.c.b16 %v168, %v166
    %v255 = vpack.c.b16 %v169, %v167
    %v256 = vpack.c.b16 %v172, %v170
    %v257 = vpack.c.b16 %v173, %v171
    %v258 = vpack.c.b16 %v176, %v174
    %v259 = vpack.c.b16 %v177, %v175
    %v260 = vpack.c.b16 %v180, %v178
    %v261 = vpack.c.b16 %v181, %v179
    %v262 = vpack.c.b16 %v184, %v182
    %v263 = vpack.c.b16 %v185, %v183
    %v264 = vpack.c.b16 %v188, %v186
    %v265 = vpack.c.b16 %v189, %v187
    %v266 = vpack.c.b16 %v192, %v190
    %v267 = vpack.c.b16 %v193, %v191
    %v268 = vpack.c.b16 %v196, %v194
    %v269 = vpack.c.b16 %v197, %v195
    %v270 = vpack.c.b16 %v200, %v198
    %v271 = vpack.c.b16 %v201, %v199
    %v272 = vpack.c.b16 %v204, %v202
    %v273 = vpack.c.b16 %v205, %v203
    %v274 = vpack.c.b16 %v208, %v206
    %v275 = vpack.c.b16 %v209, %v207
    %v276 = vpack.c.b16 %v212, %v210
    %v277 = vpack.c.b16 %v213, %v211
    %v278 = vpack.c.b16 %v216, %v214
    %v279 = vpack.c.b16 %v217, %v215
    %v280 = vpack.c.b16 %v220, %v218
    %v281 = vpack.c.b16 %v221, %v219
    %v282 = vpack.c.b16 %v224, %v222
    %v283 = vpack.c.b16 %v225, %v223
    %v284 = vpack.c.b16 %v228, %v226
    %v285 = vpack.c.b16 %v229, %v227
    %v286 = vpack.c.b16 %v232, %v230
    %v287 = vpack.c.b16 %v233, %v231
    %v288 = vpack.c.b16 %v236, %v234
    %v289 = vpack.c.b16 %v237, %v235
    %v290 = vpack.c.b16 %v240, %v238
    %v291 = vpack.c.b16 %v241, %v239
    %v292 = vpack.c.b16 %v244, %v242
    %v293 = vpack.c.b16 %v245, %v243
    %342 = vmatprep.subr.bf16.mxu0 %v261
    %343 = vmatpush1.bf16.msra.mxu0 %v260
    %344 = vmatprep.subr.bf16.mxu0 %v259
    %345 = vmatpush1.bf16.msra.mxu0 %v258
    %346 = vmatprep.subr.bf16.mxu0 %v257
    %347 = vmatpush1.bf16.msra.mxu0 %v256
    %348 = vmatprep.subr.bf16.mxu0 %v255
    %349 = vmatpush1.bf16.msra.mxu0 %v254
    %350 = vmatprep.subr.bf16.mxu0 %v253
    %351 = vmatpush1.bf16.msra.mxu0 %v252
    %352 = vmatprep.subr.bf16.mxu0 %v251
    %353 = vmatpush1.bf16.msra.mxu0 %v250
    %354 = vmatprep.subr.bf16.mxu0 %v249
    %355 = vmatpush1.bf16.msra.mxu0 %v248
    %356 = vmatprep.subr.bf16.mxu0 %v247
    %357 = vmatpush1.bf16.msra.mxu0 %v246
    %358 = vmatprep.subr.bf16.mxu0 %v277
    %359 = vmatpush2.bf16.msra.mxu0 %v276
    %360 = vmatprep.subr.bf16.mxu0 %v275
    %361 = vmatpush2.bf16.msra.mxu0 %v274
    %362 = vmatprep.subr.bf16.mxu0 %v273
    %363 = vmatpush2.bf16.msra.mxu0 %v272
    %364 = vmatprep.subr.bf16.mxu0 %v271
    %365 = vmatpush2.bf16.msra.mxu0 %v270
    %366 = vmatprep.subr.bf16.mxu0 %v269
    %367 = vmatpush2.bf16.msra.mxu0 %v268
    %368 = vmatprep.subr.bf16.mxu0 %v267
    %369 = vmatpush2.bf16.msra.mxu0 %v266
    %370 = vmatprep.subr.bf16.mxu0 %v265
    %371 = vmatpush2.bf16.msra.mxu0 %v264
    %372 = vmatprep.subr.bf16.mxu0 %v263
    %373 = vmatpush2.bf16.msra.mxu0 %v262
    %374 = vmatprep.mubr.bf16.mxu0 %v97
    %375 = vmatmul.mubr.bf16.gmra.mxu0 %v96
    %v376 = vpop.f32.mrf.mxu0
    %v377 = vadd.f32 %v84, %v376
    %v378 = vpop.f32.mrf.mxu0
    %v379 = vadd.f32 %v88, %v378
    %v380 = vpop.f32.mrf.mxu0
    %v381 = vpop.f32.mrf.mxu0
    %382 = vdwg.mxu0
    %383 = vmatprep.subr.bf16.mxu0 %v293
    %384 = vmatpush1.bf16.msra.mxu0 %v292
    %385 = vmatprep.subr.bf16.mxu0 %v291
    %386 = vmatpush1.bf16.msra.mxu0 %v290
    %387 = vmatprep.subr.bf16.mxu0 %v289
    %388 = vmatpush1.bf16.msra.mxu0 %v288
    %389 = vmatprep.subr.bf16.mxu0 %v287
    %390 = vmatpush1.bf16.msra.mxu0 %v286
    %391 = vmatprep.subr.bf16.mxu0 %v285
    %392 = vmatpush1.bf16.msra.mxu0 %v284
    %393 = vmatprep.subr.bf16.mxu0 %v283
    %394 = vmatpush1.bf16.msra.mxu0 %v282
    %395 = vmatprep.subr.bf16.mxu0 %v281
    %396 = vmatpush1.bf16.msra.mxu0 %v280
    %397 = vmatprep.subr.bf16.mxu0 %v279
    %398 = vmatpush1.bf16.msra.mxu0 %v278
    %399 = vmatprep.subr.bf16.mxu0 0
    %400 = vmatpush2.bf16.msra.mxu0 0
    %401 = vmatprep.subr.bf16.mxu0 0
    %402 = vmatpush2.bf16.msra.mxu0 0
    %403 = vmatprep.subr.bf16.mxu0 0
    %404 = vmatpush2.bf16.msra.mxu0 0
    %405 = vmatprep.subr.bf16.mxu0 0
    %406 = vmatpush2.bf16.msra.mxu0 0
    %407 = vmatprep.subr.bf16.mxu0 0
    %408 = vmatpush2.bf16.msra.mxu0 0
    %409 = vmatprep.subr.bf16.mxu0 0
    %410 = vmatpush2.bf16.msra.mxu0 0
    %411 = vmatprep.subr.bf16.mxu0 0
    %412 = vmatpush2.bf16.msra.mxu0 0
    %413 = vmatprep.subr.bf16.mxu0 0
    %414 = vmatpush2.bf16.msra.mxu0 0
    %415 = vmatprep.mubr.bf16.mxu0 0
    %416 = vmatmul.mubr.bf16.gmra.mxu0 %v98
    %v417 = vpop.f32.mrf.mxu0
    %v418 = vadd.f32 %v377, %v417
    %v419 = vpop.f32.mrf.mxu0
    %v420 = vadd.f32 %v379, %v419
    %v421 = vpop.f32.mrf.mxu0
    %v422 = vpop.f32.mrf.mxu0
    %423 = vdwg.mxu0
    %v424 = vmul.f32 %v418, 0.01
    %v425 = vmul.f32 %v420, 0.01
    %v426 = vmax.f32 %v418, %v424
    %v427 = vmax.f32 %v420, %v425
    %v428 = vpack.c.bf16 %v426, %v426
    %v429 = vpack.c.bf16 %v427, %v427
    %v430 = vld [vmem:[#allocation2 + $0x180] sm:$0xf]
    %v431 = vld [vmem:[#allocation2 + $0x188] sm:$0xf]
    %v432 = vld [vmem:[#allocation2 + $0x190] sm:$0xf]
    %v433 = vld [vmem:[#allocation2 + $0x198] sm:$0xf]
    %v434 = vld [vmem:[#allocation2 + $0x1a0] sm:$0xf]
    %v435 = vld [vmem:[#allocation2 + $0x1a8] sm:$0xf]
    %v436 = vld [vmem:[#allocation2 + $0x1b0] sm:$0xf]
    %v437 = vld [vmem:[#allocation2 + $0x1b8] sm:$0xf]
    %v438 = vld [vmem:[#allocation2 + $0x1c0] sm:$0xf]
    %v439 = vld [vmem:[#allocation2 + $0x1c8] sm:$0xf]
    %v440 = vld [vmem:[#allocation2 + $0x1d0] sm:$0xf]
    %v441 = vld [vmem:[#allocation2 + $0x1d8] sm:$0xf]
    %v442 = vld [vmem:[#allocation2 + $0x1e0] sm:$0xf]
    %v443 = vld [vmem:[#allocation2 + $0x1e8] sm:$0xf]
    %v444 = vld [vmem:[#allocation2 + $0x1f0] sm:$0xf]
    %v445 = vld [vmem:[#allocation2 + $0x1f8] sm:$0xf]
    %v446 = vld [vmem:[#allocation2 + $0x200] sm:$0xf]
    %v447 = vld [vmem:[#allocation2 + $0x208] sm:$0xf]
    %v448 = vld [vmem:[#allocation2 + $0x210] sm:$0xf]
    %v449 = vld [vmem:[#allocation2 + $0x218] sm:$0xf]
    %v450 = vld [vmem:[#allocation2 + $0x220] sm:$0xf]
    %v451 = vld [vmem:[#allocation2 + $0x228] sm:$0xf]
    %v452 = vld [vmem:[#allocation2 + $0x230] sm:$0xf]
    %v453 = vld [vmem:[#allocation2 + $0x238] sm:$0xf]
    %v454 = vld [vmem:[#allocation2 + $0x240] sm:$0xf]
    %v455 = vld [vmem:[#allocation2 + $0x248] sm:$0xf]
    %v456 = vld [vmem:[#allocation2 + $0x250] sm:$0xf]
    %v457 = vld [vmem:[#allocation2 + $0x258] sm:$0xf]
    %v458 = vld [vmem:[#allocation2 + $0x260] sm:$0xf]
    %v459 = vld [vmem:[#allocation2 + $0x268] sm:$0xf]
    %v460 = vld [vmem:[#allocation2 + $0x270] sm:$0xf]
    %v461 = vld [vmem:[#allocation2 + $0x278] sm:$0xf]
    %v462 = vld [vmem:[%s2 + $0x1] ss:$0 sm:$0xff]
    %v495 = vunpack.c.l.b16 %v430
    %v496 = vunpack.c.l.b16 %v431
    %v497 = vunpack.c.l.b16 %v432
    %v498 = vunpack.c.l.b16 %v433
    %v499 = vunpack.c.l.b16 %v434
    %v500 = vunpack.c.l.b16 %v435
    %v501 = vunpack.c.l.b16 %v436
    %v502 = vunpack.c.l.b16 %v437
    %v503 = vunpack.c.l.b16 %v438
    %v504 = vunpack.c.l.b16 %v439
    %v505 = vunpack.c.l.b16 %v440
    %v506 = vunpack.c.l.b16 %v441
    %v507 = vunpack.c.l.b16 %v442
    %v508 = vunpack.c.l.b16 %v443
    %v509 = vunpack.c.l.b16 %v444
    %v510 = vunpack.c.l.b16 %v445
    %v511 = vunpack.c.l.b16 %v446
    %v512 = vunpack.c.l.b16 %v447
    %v513 = vunpack.c.l.b16 %v448
    %v514 = vunpack.c.l.b16 %v449
    %v515 = vunpack.c.l.b16 %v450
    %v516 = vunpack.c.l.b16 %v451
    %v517 = vunpack.c.l.b16 %v452
    %v518 = vunpack.c.l.b16 %v453
    %v519 = vunpack.c.l.b16 %v454
    %v520 = vunpack.c.l.b16 %v455
    %v521 = vunpack.c.l.b16 %v456
    %v522 = vunpack.c.l.b16 %v457
    %v523 = vunpack.c.l.b16 %v458
    %v524 = vunpack.c.l.b16 %v459
    %v525 = vunpack.c.l.b16 %v460
    %v526 = vunpack.c.l.b16 %v461
    %v527 = vpack.c.b16 %v496, %v495
    %v528 = vpack.c.b16 %v498, %v497
    %v529 = vpack.c.b16 %v500, %v499
    %v530 = vpack.c.b16 %v502, %v501
    %v531 = vpack.c.b16 %v504, %v503
    %v532 = vpack.c.b16 %v506, %v505
    %v533 = vpack.c.b16 %v508, %v507
    %v534 = vpack.c.b16 %v510, %v509
    %v535 = vpack.c.b16 %v512, %v511
    %v536 = vpack.c.b16 %v514, %v513
    %v537 = vpack.c.b16 %v516, %v515
    %v538 = vpack.c.b16 %v518, %v517
    %v539 = vpack.c.b16 %v520, %v519
    %v540 = vpack.c.b16 %v522, %v521
    %v541 = vpack.c.b16 %v524, %v523
    %v542 = vpack.c.b16 %v526, %v525
    %559 = vmatprep.subr.bf16.mxu0 0
    %560 = vmatpush1.bf16.msra.mxu0 %v534
    %561 = vmatprep.subr.bf16.mxu0 0
    %562 = vmatpush1.bf16.msra.mxu0 %v533
    %563 = vmatprep.subr.bf16.mxu0 0
    %564 = vmatpush1.bf16.msra.mxu0 %v532
    %565 = vmatprep.subr.bf16.mxu0 0
    %566 = vmatpush1.bf16.msra.mxu0 %v531
    %567 = vmatprep.subr.bf16.mxu0 0
    %568 = vmatpush1.bf16.msra.mxu0 %v530
    %569 = vmatprep.subr.bf16.mxu0 0
    %570 = vmatpush1.bf16.msra.mxu0 %v529
    %571 = vmatprep.subr.bf16.mxu0 0
    %572 = vmatpush1.bf16.msra.mxu0 %v528
    %573 = vmatprep.subr.bf16.mxu0 0
    %574 = vmatpush1.bf16.msra.mxu0 %v527
    %575 = vmatprep.subr.bf16.mxu0 0
    %576 = vmatpush2.bf16.msra.mxu0 %v542
    %577 = vmatprep.subr.bf16.mxu0 0
    %578 = vmatpush2.bf16.msra.mxu0 %v541
    %579 = vmatprep.subr.bf16.mxu0 0
    %580 = vmatpush2.bf16.msra.mxu0 %v540
    %581 = vmatprep.subr.bf16.mxu0 0
    %582 = vmatpush2.bf16.msra.mxu0 %v539
    %583 = vmatprep.subr.bf16.mxu0 0
    %584 = vmatpush2.bf16.msra.mxu0 %v538
    %585 = vmatprep.subr.bf16.mxu0 0
    %586 = vmatpush2.bf16.msra.mxu0 %v537
    %587 = vmatprep.subr.bf16.mxu0 0
    %588 = vmatpush2.bf16.msra.mxu0 %v536
    %589 = vmatprep.subr.bf16.mxu0 0
    %590 = vmatpush2.bf16.msra.mxu0 %v535
    %591 = vmatprep.mubr.bf16.mxu0 %v429
    %592 = vmatmul.mubr.bf16.gmra.mxu0 %v428
    %v593 = vpop.f32.mrf.mxu0
    %v594 = vadd.f32 %v462, %v593
    %v595 = vpop.f32.mrf.mxu0
    %v596 = vpop.f32.mrf.mxu0
    %v597 = vpop.f32.mrf.mxu0
    %598 = vdwg.mxu0
    %v599 = vmul.f32 %v594, 0.01
    %v600 = vmax.f32 %v594, %v599
    %v601 = vpack.c.bf16 %v600, %v600
    %v602 = vld [vmem:[#allocation2 + $0x280] sm:$0xf]
    %v603 = vld [vmem:[#allocation2 + $0x288] sm:$0xf]
    %v604 = vld [vmem:[#allocation2 + $0x290] sm:$0xf]
    %v605 = vld [vmem:[#allocation2 + $0x298] sm:$0xf]
    %v606 = vld [vmem:[#allocation2 + $0x2a0] sm:$0xf]
    %v607 = vld [vmem:[#allocation2 + $0x2a8] sm:$0xf]
    %v608 = vld [vmem:[#allocation2 + $0x2b0] sm:$0xf]
    %v609 = vld [vmem:[#allocation2 + $0x2b8] sm:$0xf]
    %v610 = vld [vmem:[#allocation2 + $0x2c0] sm:$0xf]
    %v611 = vld [vmem:[#allocation2 + $0x2c8] sm:$0xf]
    %v612 = vld [vmem:[#allocation2 + $0x2d0] sm:$0xf]
    %v613 = vld [vmem:[#allocation2 + $0x2d8] sm:$0xf]
    %v614 = vld [vmem:[#allocation2 + $0x2e0] sm:$0xf]
    %v615 = vld [vmem:[#allocation2 + $0x2e8] sm:$0xf]
    %v616 = vld [vmem:[#allocation2 + $0x2f0] sm:$0xf]
    %v617 = vld [vmem:[#allocation2 + $0x2f8] sm:$0xf]
    %v618 = vld [vmem:[%s2 + $0x2] ss:$0 sm:$0xff]
    %v635 = vunpack.c.l.b16 %v602
    %v636 = vunpack.c.l.b16 %v603
    %v637 = vunpack.c.l.b16 %v604
    %v638 = vunpack.c.l.b16 %v605
    %v639 = vunpack.c.l.b16 %v606
    %v640 = vunpack.c.l.b16 %v607
    %v641 = vunpack.c.l.b16 %v608
    %v642 = vunpack.c.l.b16 %v609
    %v643 = vunpack.c.l.b16 %v610
    %v644 = vunpack.c.l.b16 %v611
    %v645 = vunpack.c.l.b16 %v612
    %v646 = vunpack.c.l.b16 %v613
    %v647 = vunpack.c.l.b16 %v614
    %v648 = vunpack.c.l.b16 %v615
    %v649 = vunpack.c.l.b16 %v616
    %v650 = vunpack.c.l.b16 %v617
    %v651 = vpack.c.b16 %v636, %v635
    %v652 = vpack.c.b16 %v638, %v637
    %v653 = vpack.c.b16 %v640, %v639
    %v654 = vpack.c.b16 %v642, %v641
    %v655 = vpack.c.b16 %v644, %v643
    %v656 = vpack.c.b16 %v646, %v645
    %v657 = vpack.c.b16 %v648, %v647
    %v658 = vpack.c.b16 %v650, %v649
    %667 = vmatprep.subr.bf16.mxu0 0
    %668 = vmatpush1.bf16.msra.mxu0 %v658
    %669 = vmatprep.subr.bf16.mxu0 0
    %670 = vmatpush1.bf16.msra.mxu0 %v657
    %671 = vmatprep.subr.bf16.mxu0 0
    %672 = vmatpush1.bf16.msra.mxu0 %v656
    %673 = vmatprep.subr.bf16.mxu0 0
    %674 = vmatpush1.bf16.msra.mxu0 %v655
    %675 = vmatprep.subr.bf16.mxu0 0
    %676 = vmatpush1.bf16.msra.mxu0 %v654
    %677 = vmatprep.subr.bf16.mxu0 0
    %678 = vmatpush1.bf16.msra.mxu0 %v653
    %679 = vmatprep.subr.bf16.mxu0 0
    %680 = vmatpush1.bf16.msra.mxu0 %v652
    %681 = vmatprep.subr.bf16.mxu0 0
    %682 = vmatpush1.bf16.msra.mxu0 %v651
    %683 = vmatprep.subr.bf16.mxu0 0
    %684 = vmatpush2.bf16.msra.mxu0 0
    %685 = vmatprep.subr.bf16.mxu0 0
    %686 = vmatpush2.bf16.msra.mxu0 0
    %687 = vmatprep.subr.bf16.mxu0 0
    %688 = vmatpush2.bf16.msra.mxu0 0
    %689 = vmatprep.subr.bf16.mxu0 0
    %690 = vmatpush2.bf16.msra.mxu0 0
    %691 = vmatprep.subr.bf16.mxu0 0
    %692 = vmatpush2.bf16.msra.mxu0 0
    %693 = vmatprep.subr.bf16.mxu0 0
    %694 = vmatpush2.bf16.msra.mxu0 0
    %695 = vmatprep.subr.bf16.mxu0 0
    %696 = vmatpush2.bf16.msra.mxu0 0
    %697 = vmatprep.subr.bf16.mxu0 0
    %698 = vmatpush2.bf16.msra.mxu0 0
    %699 = vmatprep.mubr.bf16.mxu0 0
    %700 = vmatmul.mubr.bf16.gmra.mxu0 %v601
    %v701 = vpop.f32.mrf.mxu0
    %v702 = vadd.f32 %v618, %v701
    %v703 = vpop.f32.mrf.mxu0
    %v704 = vpop.f32.mrf.mxu0
    %v705 = vpop.f32.mrf.mxu0
    %706 = vdwg.mxu0
    %v707 = vmul.f32 %v702, 0.01
    %v708 = vmax.f32 %v702, %v707
    %v709 = vpack.c.bf16 %v708, %v708
    %v710 = vld [vmem:[#allocation2 + $0x300] sm:$0xff]
    %v711 = vld [vmem:[#allocation2 + $0x308] sm:$0xff]
    %v712 = vld [vmem:[#allocation2 + $0x310] sm:$0xff]
    %v713 = vld [vmem:[#allocation2 + $0x318] sm:$0xff]
    %v714 = vld [vmem:[#allocation2 + $0x320] sm:$0xff]
    %v715 = vld [vmem:[#allocation2 + $0x328] sm:$0xff]
    %v716 = vld [vmem:[#allocation2 + $0x330] sm:$0xff]
    %v717 = vld [vmem:[#allocation2 + $0x338] sm:$0xff]
    %v718 = vld [vmem:[#allocation2 + $0x340] sm:$0xff]
    %v719 = vld [vmem:[#allocation2 + $0x348] sm:$0xff]
    %v720 = vld [vmem:[#allocation2 + $0x350] sm:$0xff]
    %v721 = vld [vmem:[#allocation2 + $0x358] sm:$0xff]
    %v722 = vld [vmem:[#allocation2 + $0x360] sm:$0xff]
    %v723 = vld [vmem:[#allocation2 + $0x368] sm:$0xff]
    %v724 = vld [vmem:[#allocation2 + $0x370] sm:$0xff]
    %v725 = vld [vmem:[#allocation2 + $0x378] sm:$0xff]
    %s726 = scalar_lea.vmem %s2, 3
    %v727 = vld [vmem:[%s726] ss:$8 sm:$0x3]
    %v729 = vlaneseq
    %v730 = vshrl.u32 %v729, 7
    %v731 = vsub.s32 0, %v730
    %v732 = vrot.slane %v727, %v731
    %v733 = vlaneseq
    %v734 = vshrl.u32 %v733, 7
    %v735 = vsub.s32 1, %v734
    %v736 = vrot.slane %v727, %v735
    %v755 = vunpack.c.l.b16 %v710
    %v756 = vunpack.c.h.b16 %v710
    %v757 = vunpack.c.l.b16 %v711
    %v758 = vunpack.c.h.b16 %v711
    %v759 = vunpack.c.l.b16 %v712
    %v760 = vunpack.c.h.b16 %v712
    %v761 = vunpack.c.l.b16 %v713
    %v762 = vunpack.c.h.b16 %v713
    %v763 = vunpack.c.l.b16 %v714
    %v764 = vunpack.c.h.b16 %v714
    %v765 = vunpack.c.l.b16 %v715
    %v766 = vunpack.c.h.b16 %v715
    %v767 = vunpack.c.l.b16 %v716
    %v768 = vunpack.c.h.b16 %v716
    %v769 = vunpack.c.l.b16 %v717
    %v770 = vunpack.c.h.b16 %v717
    %v771 = vunpack.c.l.b16 %v718
    %v772 = vunpack.c.h.b16 %v718
    %v773 = vunpack.c.l.b16 %v719
    %v774 = vunpack.c.h.b16 %v719
    %v775 = vunpack.c.l.b16 %v720
    %v776 = vunpack.c.h.b16 %v720
    %v777 = vunpack.c.l.b16 %v721
    %v778 = vunpack.c.h.b16 %v721
    %v779 = vunpack.c.l.b16 %v722
    %v780 = vunpack.c.h.b16 %v722
    %v781 = vunpack.c.l.b16 %v723
    %v782 = vunpack.c.h.b16 %v723
    %v783 = vunpack.c.l.b16 %v724
    %v784 = vunpack.c.h.b16 %v724
    %v785 = vunpack.c.l.b16 %v725
    %v786 = vunpack.c.h.b16 %v725
    %v787 = vpack.c.b16 %v757, %v755
    %v788 = vpack.c.b16 %v758, %v756
    %v789 = vpack.c.b16 %v761, %v759
    %v790 = vpack.c.b16 %v762, %v760
    %v791 = vpack.c.b16 %v765, %v763
    %v792 = vpack.c.b16 %v766, %v764
    %v793 = vpack.c.b16 %v769, %v767
    %v794 = vpack.c.b16 %v770, %v768
    %v795 = vpack.c.b16 %v773, %v771
    %v796 = vpack.c.b16 %v774, %v772
    %v797 = vpack.c.b16 %v777, %v775
    %v798 = vpack.c.b16 %v778, %v776
    %v799 = vpack.c.b16 %v781, %v779
    %v800 = vpack.c.b16 %v782, %v780
    %v801 = vpack.c.b16 %v785, %v783
    %v802 = vpack.c.b16 %v786, %v784
    %819 = vmatprep.subr.bf16.mxu0 %v802
    %820 = vmatpush1.bf16.msra.mxu0 %v801
    %821 = vmatprep.subr.bf16.mxu0 %v800
    %822 = vmatpush1.bf16.msra.mxu0 %v799
    %823 = vmatprep.subr.bf16.mxu0 %v798
    %824 = vmatpush1.bf16.msra.mxu0 %v797
    %825 = vmatprep.subr.bf16.mxu0 %v796
    %826 = vmatpush1.bf16.msra.mxu0 %v795
    %827 = vmatprep.subr.bf16.mxu0 %v794
    %828 = vmatpush1.bf16.msra.mxu0 %v793
    %829 = vmatprep.subr.bf16.mxu0 %v792
    %830 = vmatpush1.bf16.msra.mxu0 %v791
    %831 = vmatprep.subr.bf16.mxu0 %v790
    %832 = vmatpush1.bf16.msra.mxu0 %v789
    %833 = vmatprep.subr.bf16.mxu0 %v788
    %834 = vmatpush1.bf16.msra.mxu0 %v787
    %835 = vmatprep.subr.bf16.mxu0 0
    %836 = vmatpush2.bf16.msra.mxu0 0
    %837 = vmatprep.subr.bf16.mxu0 0
    %838 = vmatpush2.bf16.msra.mxu0 0
    %839 = vmatprep.subr.bf16.mxu0 0
    %840 = vmatpush2.bf16.msra.mxu0 0
    %841 = vmatprep.subr.bf16.mxu0 0
    %842 = vmatpush2.bf16.msra.mxu0 0
    %843 = vmatprep.subr.bf16.mxu0 0
    %844 = vmatpush2.bf16.msra.mxu0 0
    %845 = vmatprep.subr.bf16.mxu0 0
    %846 = vmatpush2.bf16.msra.mxu0 0
    %847 = vmatprep.subr.bf16.mxu0 0
    %848 = vmatpush2.bf16.msra.mxu0 0
    %849 = vmatprep.subr.bf16.mxu0 0
    %850 = vmatpush2.bf16.msra.mxu0 0
    %851 = vmatprep.mubr.bf16.mxu0 0
    %852 = vmatmul.mubr.bf16.gmra.mxu0 %v709
    %v853 = vpop.f32.mrf.mxu0
    %v854 = vadd.f32 %v732, %v853
    %v855 = vpop.f32.mrf.mxu0
    %v856 = vadd.f32 %v736, %v855
    %v857 = vpop.f32.mrf.mxu0
    %v858 = vpop.f32.mrf.mxu0
    %859 = vdwg.mxu0
    %v860 = vmul.f32 %v856, 0.01
    %v861 = vmax.f32 %v856, %v860
    %v862 = vpack.c.bf16 %v861, %v861
    %v863 = vld [vmem:[#allocation2 + $0x380] sm:$0xf]
    %v864 = vld [vmem:[#allocation2 + $0x388] sm:$0xf]
    %v865 = vld [vmem:[#allocation2 + $0x390] sm:$0xf]
    %v866 = vld [vmem:[#allocation2 + $0x398] sm:$0xf]
    %v867 = vld [vmem:[#allocation2 + $0x3a0] sm:$0xf]
    %v868 = vld [vmem:[#allocation2 + $0x3a8] sm:$0xf]
    %v869 = vld [vmem:[#allocation2 + $0x3b0] sm:$0xf]
    %v870 = vld [vmem:[#allocation2 + $0x3b8] sm:$0xf]
    %v871 = vld [vmem:[#allocation2 + $0x3c0] sm:$0xf]
    %v872 = vld [vmem:[#allocation2 + $0x3c8] sm:$0xf]
    %v873 = vld [vmem:[#allocation2 + $0x3d0] sm:$0xf]
    %v874 = vld [vmem:[#allocation2 + $0x3d8] sm:$0xf]
    %v875 = vld [vmem:[#allocation2 + $0x3e0] sm:$0xf]
    %v876 = vld [vmem:[#allocation2 + $0x3e8] sm:$0xf]
    %v877 = vld [vmem:[#allocation2 + $0x3f0] sm:$0xf]
    %v878 = vld [vmem:[#allocation2 + $0x3f8] sm:$0xf]
    %v879 = vld [vmem:[%s2 + $0x4] ss:$0 sm:$0xff]
    %v896 = vunpack.c.l.b16 %v863
    %v897 = vunpack.c.l.b16 %v864
    %v898 = vunpack.c.l.b16 %v865
    %v899 = vunpack.c.l.b16 %v866
    %v900 = vunpack.c.l.b16 %v867
    %v901 = vunpack.c.l.b16 %v868
    %v902 = vunpack.c.l.b16 %v869
    %v903 = vunpack.c.l.b16 %v870
    %v904 = vunpack.c.l.b16 %v871
    %v905 = vunpack.c.l.b16 %v872
    %v906 = vunpack.c.l.b16 %v873
    %v907 = vunpack.c.l.b16 %v874
    %v908 = vunpack.c.l.b16 %v875
    %v909 = vunpack.c.l.b16 %v876
    %v910 = vunpack.c.l.b16 %v877
    %v911 = vunpack.c.l.b16 %v878
    %v912 = vpack.c.b16 %v897, %v896
    %v913 = vpack.c.b16 %v899, %v898
    %v914 = vpack.c.b16 %v901, %v900
    %v915 = vpack.c.b16 %v903, %v902
    %v916 = vpack.c.b16 %v905, %v904
    %v917 = vpack.c.b16 %v907, %v906
    %v918 = vpack.c.b16 %v909, %v908
    %v919 = vpack.c.b16 %v911, %v910
    %928 = vmatprep.subr.bf16.mxu0 0
    %929 = vmatpush1.bf16.msra.mxu0 %v919
    %930 = vmatprep.subr.bf16.mxu0 0
    %931 = vmatpush1.bf16.msra.mxu0 %v918
    %932 = vmatprep.subr.bf16.mxu0 0
    %933 = vmatpush1.bf16.msra.mxu0 %v917
    %934 = vmatprep.subr.bf16.mxu0 0
    %935 = vmatpush1.bf16.msra.mxu0 %v916
    %936 = vmatprep.subr.bf16.mxu0 0
    %937 = vmatpush1.bf16.msra.mxu0 %v915
    %938 = vmatprep.subr.bf16.mxu0 0
    %939 = vmatpush1.bf16.msra.mxu0 %v914
    %940 = vmatprep.subr.bf16.mxu0 0
    %941 = vmatpush1.bf16.msra.mxu0 %v913
    %942 = vmatprep.subr.bf16.mxu0 0
    %943 = vmatpush1.bf16.msra.mxu0 %v912
    %944 = vmatprep.subr.bf16.mxu0 0
    %945 = vmatpush2.bf16.msra.mxu0 0
    %946 = vmatprep.subr.bf16.mxu0 0
    %947 = vmatpush2.bf16.msra.mxu0 0
    %948 = vmatprep.subr.bf16.mxu0 0
    %949 = vmatpush2.bf16.msra.mxu0 0
    %950 = vmatprep.subr.bf16.mxu0 0
    %951 = vmatpush2.bf16.msra.mxu0 0
    %952 = vmatprep.subr.bf16.mxu0 0
    %953 = vmatpush2.bf16.msra.mxu0 0
    %954 = vmatprep.subr.bf16.mxu0 0
    %955 = vmatpush2.bf16.msra.mxu0 0
    %956 = vmatprep.subr.bf16.mxu0 0
    %957 = vmatpush2.bf16.msra.mxu0 0
    %958 = vmatprep.subr.bf16.mxu0 0
    %959 = vmatpush2.bf16.msra.mxu0 0
    %960 = vmatprep.mubr.bf16.mxu0 0
    %961 = vmatmul.mubr.bf16.gmra.mxu0 %v862
    %v962 = vpop.f32.mrf.mxu0
    %v963 = vadd.f32 %v879, %v962
    %v964 = vpop.f32.mrf.mxu0
    %v965 = vpop.f32.mrf.mxu0
    %v966 = vpop.f32.mrf.mxu0
    %967 = vdwg.mxu0
    %v968 = vmul.f32 %v963, 0.01
    %v969 = vmax.f32 %v963, %v968
    %v970 = vpack.c.bf16 %v969, %v969
    %v971 = vld [vmem:[#allocation2 + $0x400] sm:$0xf]
    %v972 = vld [vmem:[#allocation2 + $0x408] sm:$0xf]
    %v973 = vld [vmem:[#allocation2 + $0x410] sm:$0xf]
    %v974 = vld [vmem:[#allocation2 + $0x418] sm:$0xf]
    %v975 = vld [vmem:[#allocation2 + $0x420] sm:$0xf]
    %v976 = vld [vmem:[#allocation2 + $0x428] sm:$0xf]
    %v977 = vld [vmem:[#allocation2 + $0x430] sm:$0xf]
    %v978 = vld [vmem:[#allocation2 + $0x438] sm:$0xf]
    %v979 = vld [vmem:[#allocation2 + $0x440] sm:$0xf]
    %v980 = vld [vmem:[#allocation2 + $0x448] sm:$0xf]
    %v981 = vld [vmem:[#allocation2 + $0x450] sm:$0xf]
    %v982 = vld [vmem:[#allocation2 + $0x458] sm:$0xf]
    %v983 = vld [vmem:[#allocation2 + $0x460] sm:$0xf]
    %v984 = vld [vmem:[#allocation2 + $0x468] sm:$0xf]
    %v985 = vld [vmem:[#allocation2 + $0x470] sm:$0xf]
    %v986 = vld [vmem:[#allocation2 + $0x478] sm:$0xf]
    %v987 = vld [vmem:[%s2 + $0x5] ss:$0 sm:$0xff]
    %v1004 = vunpack.c.l.b16 %v971
    %v1005 = vunpack.c.l.b16 %v972
    %v1006 = vunpack.c.l.b16 %v973
    %v1007 = vunpack.c.l.b16 %v974
    %v1008 = vunpack.c.l.b16 %v975
    %v1009 = vunpack.c.l.b16 %v976
    %v1010 = vunpack.c.l.b16 %v977
    %v1011 = vunpack.c.l.b16 %v978
    %v1012 = vunpack.c.l.b16 %v979
    %v1013 = vunpack.c.l.b16 %v980
    %v1014 = vunpack.c.l.b16 %v981
    %v1015 = vunpack.c.l.b16 %v982
    %v1016 = vunpack.c.l.b16 %v983
    %v1017 = vunpack.c.l.b16 %v984
    %v1018 = vunpack.c.l.b16 %v985
    %v1019 = vunpack.c.l.b16 %v986
    %v1020 = vpack.c.b16 %v1005, %v1004
    %v1021 = vpack.c.b16 %v1007, %v1006
    %v1022 = vpack.c.b16 %v1009, %v1008
    %v1023 = vpack.c.b16 %v1011, %v1010
    %v1024 = vpack.c.b16 %v1013, %v1012
    %v1025 = vpack.c.b16 %v1015, %v1014
    %v1026 = vpack.c.b16 %v1017, %v1016
    %v1027 = vpack.c.b16 %v1019, %v1018
    %1036 = vmatprep.subr.bf16.mxu0 0
    %1037 = vmatpush1.bf16.msra.mxu0 %v1027
    %1038 = vmatprep.subr.bf16.mxu0 0
    %1039 = vmatpush1.bf16.msra.mxu0 %v1026
    %1040 = vmatprep.subr.bf16.mxu0 0
    %1041 = vmatpush1.bf16.msra.mxu0 %v1025
    %1042 = vmatprep.subr.bf16.mxu0 0
    %1043 = vmatpush1.bf16.msra.mxu0 %v1024
    %1044 = vmatprep.subr.bf16.mxu0 0
    %1045 = vmatpush1.bf16.msra.mxu0 %v1023
    %1046 = vmatprep.subr.bf16.mxu0 0
    %1047 = vmatpush1.bf16.msra.mxu0 %v1022
    %1048 = vmatprep.subr.bf16.mxu0 0
    %1049 = vmatpush1.bf16.msra.mxu0 %v1021
    %1050 = vmatprep.subr.bf16.mxu0 0
    %1051 = vmatpush1.bf16.msra.mxu0 %v1020
    %1052 = vmatprep.subr.bf16.mxu0 0
    %1053 = vmatpush2.bf16.msra.mxu0 0
    %1054 = vmatprep.subr.bf16.mxu0 0
    %1055 = vmatpush2.bf16.msra.mxu0 0
    %1056 = vmatprep.subr.bf16.mxu0 0
    %1057 = vmatpush2.bf16.msra.mxu0 0
    %1058 = vmatprep.subr.bf16.mxu0 0
    %1059 = vmatpush2.bf16.msra.mxu0 0
    %1060 = vmatprep.subr.bf16.mxu0 0
    %1061 = vmatpush2.bf16.msra.mxu0 0
    %1062 = vmatprep.subr.bf16.mxu0 0
    %1063 = vmatpush2.bf16.msra.mxu0 0
    %1064 = vmatprep.subr.bf16.mxu0 0
    %1065 = vmatpush2.bf16.msra.mxu0 0
    %1066 = vmatprep.subr.bf16.mxu0 0
    %1067 = vmatpush2.bf16.msra.mxu0 0
    %1068 = vmatprep.mubr.bf16.mxu0 0
    %1069 = vmatmul.mubr.bf16.gmra.mxu0 %v970
    %v1070 = vpop.f32.mrf.mxu0
    %v1071 = vadd.f32 %v987, %v1070
    %v1072 = vpop.f32.mrf.mxu0
    %v1073 = vpop.f32.mrf.mxu0
    %v1074 = vpop.f32.mrf.mxu0
    %1075 = vdwg.mxu0
    %v1076 = vsub.f32 0.0, %v1071
    %v1077 = vmul.f32 %v1076, 1.442695
    %v1078 = vpow.pop %v1077
    %v1079 = vadd.f32 %v1078, 1.0
    %v1080 = vrcp.pop %v1079
    %v1081 = vlaneseq
    %v1082 = vand.u32 %v1081, 127
    %vm1083 = vcmp.eq.s32.totalorder %v1082, 4
    %v1084 = vsel %vm1083, %v1080, %v854
    %1085 = vst [vmem:[%s3] sm:$0xff] %v1084
    // Predicated region
    $region18: #{dann_forward.1} parent=1 // pred_check
      _
    $region19: #{dann_forward.1} parent=1 // pred_check_branch
      %1087 = sbr.rel (0) target = $region21
    $region20: #{dann_forward.1} parent=1 // pred_region
      _
    $region21: #{dann_forward.1} parent=1 // pred_fallthru
      _
    // Predicated region
    $region22: #{dann_forward.1} parent=1 // pred_check
      _
    $region23: #{dann_forward.1} parent=1 // pred_check_branch
      %1089 = sbr.rel (0) target = $region25
    $region24: #{dann_forward.1} parent=1 // pred_region
      _
    $region25: #{dann_forward.1} parent=1 // pred_fallthru
      _
    %1090 = vsyncpa [#allocation3], 1

</llo_original>
